<compile_context>
chip_gen: v7x
topology: tpu7x:2x2x1
jax: 0.10.0
libtpu: 0.0.40
codegen_flags: <defaults>
</compile_context>

<pallas_src>
import functools

import numpy as np
import jax
import jax.numpy as jnp
from jax.experimental import pallas as pl
from jax.experimental.pallas import tpu as pltpu


def _round_up(x: int, m: int) -> int:
    return ((x + m - 1) // m) * m


# ----------------------------------------------------------------------------
# Kernel 1: barycentric UV interpolation + nearest-neighbour texel index.
#   inputs  (channel-major, lane-dense): bary (3, P), u_verts (3, P), v_verts (3, P)
#   output: flat colormap index iy*Wm + ix, int32, shape (1, P)
# ----------------------------------------------------------------------------
def uv_index_kernel(bary_ref, u_ref, v_ref, idx_ref, *, Hm, Wm):
    b0 = bary_ref[0:1, :]
    b1 = bary_ref[1:2, :]
    b2 = bary_ref[2:3, :]
    # 3-term reduction as unrolled VPU multiply-adds (deliberately NOT an MXU matmul).
    u = b0 * u_ref[0:1, :] + b1 * u_ref[1:2, :] + b2 * u_ref[2:3, :]
    v = b0 * v_ref[0:1, :] + b1 * v_ref[1:2, :] + b2 * v_ref[2:3, :]
    # TODO(synk): pytorch3d TexturesUV uses bilinear F.grid_sample; nearest sampling here.
    fx = jnp.clip(jnp.floor(u * (Wm - 1) + 0.5), 0.0, Wm - 1)
    fy = jnp.clip(jnp.floor((1.0 - v) * (Hm - 1) + 0.5), 0.0, Hm - 1)
    idx_ref[...] = fy.astype(jnp.int32) * Wm + fx.astype(jnp.int32)


def interp_and_index(bary_cm, u_cm, v_cm, *, Hm, Wm, tile):
    P = bary_cm.shape[1]
    return pl.pallas_call(
        functools.partial(uv_index_kernel, Hm=Hm, Wm=Wm),
        out_shape=jax.ShapeDtypeStruct((1, P), jnp.int32),
        grid=(P // tile,),
        in_specs=[pl.BlockSpec((3, tile), lambda i: (0, i)),
                  pl.BlockSpec((3, tile), lambda i: (0, i)),
                  pl.BlockSpec((3, tile), lambda i: (0, i))],
        out_specs=pl.BlockSpec((1, tile), lambda i: (0, i)),
        compiler_params=pltpu.CompilerParams(
            dimension_semantics=("parallel",)),
    )(bary_cm, u_cm, v_cm)


# ----------------------------------------------------------------------------
# Kernel 2: hard_rgb_blend -> one RGBA slab.
#   inputs : texels (3, P) f32 channel-major, pix_to_face slot-0 (1, P) int32
#   output : rgba (4, P) f32 (rows 0..2 = rgb, row 3 = alpha = 1 - is_background)
#   background colour baked in as compile-time scalars (BlendParams is static).
# ----------------------------------------------------------------------------
def blend_kernel(tex_ref, p2f_ref, out_ref, *, bg):
    is_bg = p2f_ref[...] < 0                                   # (1, T) bool
    tex = tex_ref[...]                                         # (3, T)
    for c in range(3):                                         # unrolled, lane-dense stores
        out_ref[c:c + 1, :] = jnp.where(is_bg, bg[c], tex[c:c + 1, :])
    out_ref[3:4, :] = 1.0 - is_bg.astype(jnp.float32)


def hard_rgb_blend_pallas(texels_cm, p2f_cm, *, bg, tile):
    P = texels_cm.shape[1]
    return pl.pallas_call(
        functools.partial(blend_kernel, bg=bg),
        out_shape=jax.ShapeDtypeStruct((4, P), jnp.float32),
        grid=(P // tile,),
        in_specs=[pl.BlockSpec((3, tile), lambda i: (0, i)),
                  pl.BlockSpec((1, tile), lambda i: (0, i))],
        out_specs=pl.BlockSpec((4, tile), lambda i: (0, i)),
        compiler_params=pltpu.CompilerParams(
            dimension_semantics=("parallel",)),
    )(texels_cm, p2f_cm)


# ----------------------------------------------------------------------------
# Full shader forward (UVsCorrespondenceShader.forward)
# ----------------------------------------------------------------------------
@functools.partial(jax.jit, static_argnums=(4, 5))
def _forward(pix_to_face, bary_coords, faces_uvs, colormap, bg, tile):
    N, H, W, K = pix_to_face.shape
    F = faces_uvs.shape[0]
    Hm, Wm, _ = colormap.shape
    Ppix = N * H * W

    # Only the K=0 faces-per-pixel slot contributes to hard_rgb_blend's output.
    p2f0 = pix_to_face[..., 0].reshape(Ppix).astype(jnp.int32)              # (Ppix,)
    bary0 = bary_coords[..., 0, :].reshape(Ppix, 3).astype(jnp.float32)     # (Ppix, 3)

    # Gather per-pixel face-vertex UVs directly in channel-major layout:
    # faces_uvs (F,3,2) -> (2,3,F); gather along the face axis -> (2,3,Ppix).
    fuv_cm = jnp.transpose(faces_uvs.astype(jnp.float32), (2, 1, 0))        # (2, 3, F)
    safe_face = jnp.clip(p2f0, 0, F - 1)
    pix_uv = jnp.take(fuv_cm, safe_face, axis=2)                            # (2, 3, Ppix)
    u_cm = pix_uv[0]                                                        # (3, Ppix)
    v_cm = pix_uv[1]                                                        # (3, Ppix)
    bary_cm = bary0.T                                                       # (3, Ppix)

    # Pad the pixel (lane) axis to a tile multiple (tile is a multiple of 128).
    tile_sel = min(tile, _round_up(Ppix, 128))
    P_pad = _round_up(Ppix, tile_sel)
    pad = P_pad - Ppix
    if pad:
        bary_cm = jnp.pad(bary_cm, ((0, 0), (0, pad)))
        u_cm = jnp.pad(u_cm, ((0, 0), (0, pad)))
        v_cm = jnp.pad(v_cm, ((0, 0), (0, pad)))
        p2f0 = jnp.pad(p2f0, (0, pad), constant_values=-1)
    p2f_cm = p2f0.reshape(1, P_pad)

    # Pallas kernel 1: barycentric interp + flat texel index (single int32 output).
    idx = interp_and_index(bary_cm, u_cm, v_cm, Hm=Hm, Wm=Wm, tile=tile_sel)  # (1, P_pad)

    # XLA gather: sample colormap, produced channel-major for kernel 2.
    # TODO(synk): could be fused in-kernel with a VMEM-resident colormap when it fits
    #             (watch v7x 64 MiB VMEM); kept in XLA for robustness.
    cmap_cm = colormap.astype(jnp.float32).reshape(Hm * Wm, 3).T              # (3, Hm*Wm)
    texels_cm = jnp.take(cmap_cm, idx[0], axis=1)                             # (3, P_pad)

    # Pallas kernel 2: hard_rgb_blend -> single RGBA slab.
    rgba = hard_rgb_blend_pallas(texels_cm, p2f_cm, bg=bg, tile=tile_sel)     # (4, P_pad)

    return rgba[:, :Ppix].T.reshape(N, H, W, 4)


def uvs_correspondence_shader_forward(pix_to_face, bary_coords, faces_uvs, colormap,
                                      background_color=(0.0, 0.0, 0.0), *, tile=2048):
    """
    pix_to_face : (N, H, W, K) int32, -1 == background
    bary_coords : (N, H, W, K, 3) float32
    faces_uvs   : (F, 3, 2) float32  per-face vertex UVs in [0, 1]
    colormap    : (Hm, Wm, 3) float32
    background_color : length-3 sequence / array (BlendParams.background_color)
    returns     : (N, H, W, 4) float32
    """
    bg = tuple(float(c) for c in
               np.asarray(background_color, dtype=np.float32).reshape(-1))
    assert len(bg) == 3, "background_color must have 3 components"
    return _forward(pix_to_face, bary_coords, faces_uvs, colormap, bg, int(tile))


if __name__ == "__main__":
    # Small deterministic example (mirrors a rasterizer output at tiny resolution).
    N, H, W, K = 2, 16, 16, 1       # batch, image height/width, faces-per-pixel
    F = 20                          # number of mesh faces
    Hm = Wm = 32                    # colormap resolution

    key = jax.random.PRNGKey(0)
    k1, k2, k3, k4 = jax.random.split(key, 4)

    # pix_to_face: ~25% background (-1), rest a valid face id.
    pix_to_face = jax.random.randint(k1, (N, H, W, K), minval=-5, maxval=F)
    pix_to_face = jnp.where(pix_to_face < 0, -1, pix_to_face).astype(jnp.int32)

    # barycentric coordinates: positive, normalized to sum to 1.
    bary_raw = jax.random.uniform(k2, (N, H, W, K, 3), minval=0.1, maxval=1.0)
    bary_coords = (bary_raw / jnp.sum(bary_raw, axis=-1, keepdims=True)).astype(jnp.float32)

    # deterministic "parameters": per-face vertex UVs and the colormap texture.
    faces_uvs = jax.random.uniform(k3, (F, 3, 2), dtype=jnp.float32)
    colormap = jax.random.uniform(k4, (Hm, Wm, 3), dtype=jnp.float32)

    # BlendParams(background_color=[0, 0, 0])
    images = uvs_correspondence_shader_forward(
        pix_to_face, bary_coords, faces_uvs, colormap, background_color=[0, 0, 0])
    images = jax.block_until_ready(images)

    assert images.shape == (N, H, W, 4)
    assert images.dtype == jnp.float32

    # --- plain-JAX reference of sample (nearest) + hard_rgb_blend ---
    is_bg = pix_to_face[..., 0] < 0
    fuv = faces_uvs[jnp.clip(pix_to_face[..., 0], 0, F - 1)]          # (N,H,W,3,2)
    b = bary_coords[..., 0, :]
    u = b[..., 0] * fuv[..., 0, 0] + b[..., 1] * fuv[..., 1, 0] + b[..., 2] * fuv[..., 2, 0]
    v = b[..., 0] * fuv[..., 0, 1] + b[..., 1] * fuv[..., 1, 1] + b[..., 2] * fuv[..., 2, 1]
    ix = jnp.clip(jnp.floor(u * (Wm - 1) + 0.5), 0, Wm - 1).astype(jnp.int32)
    iy = jnp.clip(jnp.floor((1.0 - v) * (Hm - 1) + 0.5), 0, Hm - 1).astype(jnp.int32)
    ref_rgb = jnp.where(is_bg[..., None], 0.0, colormap[iy, ix])
    ref_alpha = 1.0 - is_bg.astype(jnp.float32)

    # exact checks (no float sensitivity): alpha mask and background zeros
    assert bool(jnp.all(images[..., 3] == ref_alpha))
    assert bool(jnp.all(jnp.where(is_bg[..., None], images[..., :3] == 0.0, True)))
    # texel check: tolerate a couple of pixels where nearest-neighbour rounding sits
    # exactly on a texel boundary (1-ulp XLA vs Pallas summation-order difference).
    mism = jnp.sum(jnp.any(jnp.abs(images[..., :3] - ref_rgb) > 1e-5, axis=-1))
    assert int(mism) <= 4

    # K > 1 also works now (blend uses only the K=0 slot, like pytorch3d hard_rgb_blend).
    imgs_k2 = uvs_correspondence_shader_forward(
        jnp.tile(pix_to_face, (1, 1, 1, 2)),
        jnp.tile(bary_coords, (1, 1, 1, 2, 1)),
        faces_uvs, colormap)
    imgs_k2 = jax.block_until_ready(imgs_k2)
    assert imgs_k2.shape == (N, H, W, 4)

    print("KERNEL_OK")
</pallas_src>

<mosaic_0001>
module attributes {stable_mosaic.version = 11 : i64} {
  func.func @uv_index_kernel(%arg0: i32, %arg1: memref<3x512xf32, #tpu.memory_space<vmem>>, %arg2: memref<3x512xf32, #tpu.memory_space<vmem>>, %arg3: memref<3x512xf32, #tpu.memory_space<vmem>>, %arg4: memref<1x512xi32, #tpu.memory_space<vmem>>) attributes {dimension_semantics = [#tpu.dimension_semantics<parallel>], iteration_bounds = array<i64: 1>, scalar_prefetch = 0 : i64, scratch_operands = 0 : i64, tpu.core_type = #tpu.core_type<tc>, window_params = [{transform_indices = @transform_0, window_bounds = array<i64: 3, 512>}, {transform_indices = @transform_1, window_bounds = array<i64: 3, 512>}, {transform_indices = @transform_2, window_bounds = array<i64: 3, 512>}, {transform_indices = @transform_3, window_bounds = array<i64: 1, 512>}]} {
    %c0 = arith.constant 0 : index
    %c0_0 = arith.constant 0 : index
    %0 = vector.load %arg1[%c0, %c0_0] : memref<3x512xf32, #tpu.memory_space<vmem>>, vector<1x512xf32>
    %c1 = arith.constant 1 : index
    %c0_1 = arith.constant 0 : index
    %1 = vector.load %arg1[%c1, %c0_1] : memref<3x512xf32, #tpu.memory_space<vmem>>, vector<1x512xf32>
    %c2 = arith.constant 2 : index
    %c0_2 = arith.constant 0 : index
    %2 = vector.load %arg1[%c2, %c0_2] : memref<3x512xf32, #tpu.memory_space<vmem>>, vector<1x512xf32>
    %c0_3 = arith.constant 0 : index
    %c0_4 = arith.constant 0 : index
    %3 = vector.load %arg2[%c0_3, %c0_4] : memref<3x512xf32, #tpu.memory_space<vmem>>, vector<1x512xf32>
    %4 = arith.mulf %0, %3 : vector<1x512xf32>
    %c1_5 = arith.constant 1 : index
    %c0_6 = arith.constant 0 : index
    %5 = vector.load %arg2[%c1_5, %c0_6] : memref<3x512xf32, #tpu.memory_space<vmem>>, vector<1x512xf32>
    %6 = arith.mulf %1, %5 : vector<1x512xf32>
    %7 = arith.addf %4, %6 : vector<1x512xf32>
    %c2_7 = arith.constant 2 : index
    %c0_8 = arith.constant 0 : index
    %8 = vector.load %arg2[%c2_7, %c0_8] : memref<3x512xf32, #tpu.memory_space<vmem>>, vector<1x512xf32>
    %9 = arith.mulf %2, %8 : vector<1x512xf32>
    %10 = arith.addf %7, %9 : vector<1x512xf32>
    %c0_9 = arith.constant 0 : index
    %c0_10 = arith.constant 0 : index
    %11 = vector.load %arg3[%c0_9, %c0_10] : memref<3x512xf32, #tpu.memory_space<vmem>>, vector<1x512xf32>
    %12 = arith.mulf %0, %11 : vector<1x512xf32>
    %c1_11 = arith.constant 1 : index
    %c0_12 = arith.constant 0 : index
    %13 = vector.load %arg3[%c1_11, %c0_12] : memref<3x512xf32, #tpu.memory_space<vmem>>, vector<1x512xf32>
    %14 = arith.mulf %1, %13 : vector<1x512xf32>
    %15 = arith.addf %12, %14 : vector<1x512xf32>
    %c2_13 = arith.constant 2 : index
    %c0_14 = arith.constant 0 : index
    %16 = vector.load %arg3[%c2_13, %c0_14] : memref<3x512xf32, #tpu.memory_space<vmem>>, vector<1x512xf32>
    %17 = arith.mulf %2, %16 : vector<1x512xf32>
    %18 = arith.addf %15, %17 : vector<1x512xf32>
    %cst = arith.constant 3.100000e+01 : f32
    %19 = vector.broadcast %cst : f32 to vector<1x512xf32>
    %20 = arith.mulf %10, %19 : vector<1x512xf32>
    %cst_15 = arith.constant 5.000000e-01 : f32
    %21 = vector.broadcast %cst_15 : f32 to vector<1x512xf32>
    %22 = arith.addf %20, %21 : vector<1x512xf32>
    %23 = math.floor %22 : vector<1x512xf32>
    %cst_16 = arith.constant 0.000000e+00 : f32
    %c31_i32 = arith.constant 31 : i32
    %24 = vector.broadcast %cst_16 : f32 to vector<1x512xf32>
    %25 = arith.maximumf %24, %23 : vector<1x512xf32>
    %26 = arith.sitofp %c31_i32 : i32 to f32
    %27 = vector.broadcast %26 : f32 to vector<1x512xf32>
    %28 = arith.minimumf %27, %25 : vector<1x512xf32>
    %cst_17 = arith.constant 1.000000e+00 : f32
    %29 = vector.broadcast %cst_17 : f32 to vector<1x512xf32>
    %30 = arith.subf %29, %18 : vector<1x512xf32>
    %cst_18 = arith.constant 3.100000e+01 : f32
    %31 = vector.broadcast %cst_18 : f32 to vector<1x512xf32>
    %32 = arith.mulf %30, %31 : vector<1x512xf32>
    %cst_19 = arith.constant 5.000000e-01 : f32
    %33 = vector.broadcast %cst_19 : f32 to vector<1x512xf32>
    %34 = arith.addf %32, %33 : vector<1x512xf32>
    %35 = math.floor %34 : vector<1x512xf32>
    %cst_20 = arith.constant 0.000000e+00 : f32
    %c31_i32_21 = arith.constant 31 : i32
    %36 = vector.broadcast %cst_20 : f32 to vector<1x512xf32>
    %37 = arith.maximumf %36, %35 : vector<1x512xf32>
    %38 = arith.sitofp %c31_i32_21 : i32 to f32
    %39 = vector.broadcast %38 : f32 to vector<1x512xf32>
    %40 = arith.minimumf %39, %37 : vector<1x512xf32>
    %41 = arith.fptosi %40 : vector<1x512xf32> to vector<1x512xi32>
    %c32_i32 = arith.constant 32 : i32
    %42 = vector.broadcast %c32_i32 : i32 to vector<1x512xi32>
    %43 = arith.muli %41, %42 : vector<1x512xi32>
    %44 = arith.fptosi %28 : vector<1x512xf32> to vector<1x512xi32>
    %45 = arith.addi %43, %44 : vector<1x512xi32>
    %c0_22 = arith.constant 0 : index
    %c0_23 = arith.constant 0 : index
    %46 = vector.load %arg4[%c0_22, %c0_23] : memref<1x512xi32, #tpu.memory_space<vmem>>, vector<1x512xi32>
    tpu.vector_store %arg4[%c0_22, %c0_23], %45 {strides = array<i32>} : memref<1x512xi32, #tpu.memory_space<vmem>>, vector<1x512xi32>,
    return
  }
  func.func @transform_0(%arg0: i32) -> (i32, i32) {
    %c0_i32 = arith.constant 0 : i32
    %c0_i32_0 = arith.constant 0 : i32
    return %c0_i32, %arg0 : i32, i32
  }
  func.func @transform_1(%arg0: i32) -> (i32, i32) {
    %c0_i32 = arith.constant 0 : i32
    %c0_i32_0 = arith.constant 0 : i32
    return %c0_i32, %arg0 : i32, i32
  }
  func.func @transform_2(%arg0: i32) -> (i32, i32) {
    %c0_i32 = arith.constant 0 : i32
    %c0_i32_0 = arith.constant 0 : i32
    return %c0_i32, %arg0 : i32, i32
  }
  func.func @transform_3(%arg0: i32) -> (i32, i32) {
    %c0_i32 = arith.constant 0 : i32
    %c0_i32_0 = arith.constant 0 : i32
    return %c0_i32, %arg0 : i32, i32
  }
}

module attributes {stable_mosaic.version = 11 : i64} {
  func.func @blend_kernel(%arg0: i32, %arg1: memref<3x512xf32, #tpu.memory_space<vmem>>, %arg2: memref<1x512xi32, #tpu.memory_space<vmem>>, %arg3: memref<4x512xf32, #tpu.memory_space<vmem>>) attributes {dimension_semantics = [#tpu.dimension_semantics<parallel>], iteration_bounds = array<i64: 1>, scalar_prefetch = 0 : i64, scratch_operands = 0 : i64, tpu.core_type = #tpu.core_type<tc>, window_params = [{transform_indices = @transform_0, window_bounds = array<i64: 3, 512>}, {transform_indices = @transform_1, window_bounds = array<i64: 1, 512>}, {transform_indices = @transform_2, window_bounds = array<i64: 4, 512>}]} {
    %c0 = arith.constant 0 : index
    %c0_0 = arith.constant 0 : index
    %0 = vector.load %arg2[%c0, %c0_0] : memref<1x512xi32, #tpu.memory_space<vmem>>, vector<1x512xi32>
    %c0_i32 = arith.constant 0 : i32
    %1 = vector.broadcast %c0_i32 : i32 to vector<1x512xi32>
    %2 = arith.cmpi slt, %0, %1 : vector<1x512xi32>
    %c0_1 = arith.constant 0 : index
    %c0_2 = arith.constant 0 : index
    %3 = vector.load %arg1[%c0_1, %c0_2] : memref<3x512xf32, #tpu.memory_space<vmem>>, vector<3x512xf32>
    %4 = vector.extract_strided_slice %3 {offsets = [0, 0], sizes = [1, 512], strides = [1, 1]} : vector<3x512xf32> to vector<1x512xf32>
    %cst = arith.constant 0.000000e+00 : f32
    %5 = vector.broadcast %cst : f32 to vector<1x512xf32>
    %6 = arith.select %2, %5, %4 : vector<1x512xi1>, vector<1x512xf32>
    %c0_3 = arith.constant 0 : index
    %c0_4 = arith.constant 0 : index
    %7 = vector.load %arg3[%c0_3, %c0_4] : memref<4x512xf32, #tpu.memory_space<vmem>>, vector<1x512xf32>
    tpu.vector_store %arg3[%c0_3, %c0_4], %6 {strides = array<i32>} : memref<4x512xf32, #tpu.memory_space<vmem>>, vector<1x512xf32>,
    %8 = vector.extract_strided_slice %3 {offsets = [1, 0], sizes = [1, 512], strides = [1, 1]} : vector<3x512xf32> to vector<1x512xf32>
    %cst_5 = arith.constant 0.000000e+00 : f32
    %9 = vector.broadcast %cst_5 : f32 to vector<1x512xf32>
    %10 = arith.select %2, %9, %8 : vector<1x512xi1>, vector<1x512xf32>
    %c1 = arith.constant 1 : index
    %c0_6 = arith.constant 0 : index
    %11 = vector.load %arg3[%c1, %c0_6] : memref<4x512xf32, #tpu.memory_space<vmem>>, vector<1x512xf32>
    tpu.vector_store %arg3[%c1, %c0_6], %10 {strides = array<i32>} : memref<4x512xf32, #tpu.memory_space<vmem>>, vector<1x512xf32>,
    %12 = vector.extract_strided_slice %3 {offsets = [2, 0], sizes = [1, 512], strides = [1, 1]} : vector<3x512xf32> to vector<1x512xf32>
    %cst_7 = arith.constant 0.000000e+00 : f32
    %13 = vector.broadcast %cst_7 : f32 to vector<1x512xf32>
    %14 = arith.select %2, %13, %12 : vector<1x512xi1>, vector<1x512xf32>
    %c2 = arith.constant 2 : index
    %c0_8 = arith.constant 0 : index
    %15 = vector.load %arg3[%c2, %c0_8] : memref<4x512xf32, #tpu.memory_space<vmem>>, vector<1x512xf32>
    tpu.vector_store %arg3[%c2, %c0_8], %14 {strides = array<i32>} : memref<4x512xf32, #tpu.memory_space<vmem>>, vector<1x512xf32>,
    %16 = arith.extui %2 : vector<1x512xi1> to vector<1x512xi32>
    %17 = arith.sitofp %16 : vector<1x512xi32> to vector<1x512xf32>
    %cst_9 = arith.constant 1.000000e+00 : f32
    %18 = vector.broadcast %cst_9 : f32 to vector<1x512xf32>
    %19 = arith.subf %18, %17 : vector<1x512xf32>
    %c3 = arith.constant 3 : index
    %c0_10 = arith.constant 0 : index
    %20 = vector.load %arg3[%c3, %c0_10] : memref<4x512xf32, #tpu.memory_space<vmem>>, vector<1x512xf32>
    tpu.vector_store %arg3[%c3, %c0_10], %19 {strides = array<i32>} : memref<4x512xf32, #tpu.memory_space<vmem>>, vector<1x512xf32>,
    return
  }
  func.func @transform_0(%arg0: i32) -> (i32, i32) {
    %c0_i32 = arith.constant 0 : i32
    %c0_i32_0 = arith.constant 0 : i32
    return %c0_i32, %arg0 : i32, i32
  }
  func.func @transform_1(%arg0: i32) -> (i32, i32) {
    %c0_i32 = arith.constant 0 : i32
    %c0_i32_0 = arith.constant 0 : i32
    return %c0_i32, %arg0 : i32, i32
  }
  func.func @transform_2(%arg0: i32) -> (i32, i32) {
    %c0_i32 = arith.constant 0 : i32
    %c0_i32_0 = arith.constant 0 : i32
    return %c0_i32, %arg0 : i32, i32
  }
}

</mosaic_0001>

<llo_original>
// kernel: squeeze.10
$region0: #{squeeze.10}
  %s0 = inlined_call_operand.vmem [shape: s32[2,16,16], index: 0, kind: input, shape index: {}]
  %s1 = inlined_call_operand.vmem [shape: s32[1,512], index: 1, kind: output, shape index: {}]
  $region1: #{squeeze.10} parent=0
    #allocation0 [shape = 'u8[16384]{0}', space=vmem, size = 0x4000, scoped, tag = 'scoped mem for output reshape']
    %v2 = vld [vmem:[%s0] ss:$8 sm:$0xf]
    %vm3 = vcmask 130048
    %4 = vst.msk [vmem:[#allocation0] ss:$8 sm:$0xf] %vm3, %v2
    %s5 = scalar_lea.vmem %s0, 7
    %v6 = vld [vmem:[%s5] ss:$8 sm:$0xf]
    %7 = vrot.lane.b32.xlu0 %v6, 112
    %v8 = vpop.permute.xlu0 %7
    %vm9 = vcmask 1048448
    %10 = vst.msk [vmem:[#allocation0] ss:$8 sm:$0xf] %vm9, %v8
    %s11 = scalar_lea.vmem %s0, 6
    %v12 = vld [vmem:[%s11] ss:$8 sm:$0xf]
    %13 = vrot.lane.b32.xlu0 %v12, 96
    %v14 = vpop.permute.xlu0 %13
    %vm15 = vcmask 917248
    %16 = vst.msk [vmem:[#allocation0] ss:$8 sm:$0xf] %vm15, %v14
    %s17 = scalar_lea.vmem %s0, 5
    %v18 = vld [vmem:[%s17] ss:$8 sm:$0xf]
    %19 = vrot.lane.b32.xlu0 %v18, 80
    %v20 = vpop.permute.xlu0 %19
    %vm21 = vcmask 786048
    %22 = vst.msk [vmem:[#allocation0] ss:$8 sm:$0xf] %vm21, %v20
    %s23 = scalar_lea.vmem %s0, 4
    %v24 = vld [vmem:[%s23] ss:$8 sm:$0xf]
    %25 = vrot.lane.b32.xlu0 %v24, 64
    %v26 = vpop.permute.xlu0 %25
    %vm27 = vcmask 654848
    %28 = vst.msk [vmem:[#allocation0] ss:$8 sm:$0xf] %vm27, %v26
    %s29 = scalar_lea.vmem %s0, 3
    %v30 = vld [vmem:[%s29] ss:$8 sm:$0xf]
    %31 = vrot.lane.b32.xlu0 %v30, 48
    %v32 = vpop.permute.xlu0 %31
    %vm33 = vcmask 523648
    %34 = vst.msk [vmem:[#allocation0] ss:$8 sm:$0xf] %vm33, %v32
    %s35 = scalar_lea.vmem %s0, 2
    %v36 = vld [vmem:[%s35] ss:$8 sm:$0xf]
    %37 = vrot.lane.b32.xlu0 %v36, 32
    %v38 = vpop.permute.xlu0 %37
    %vm39 = vcmask 392448
    %40 = vst.msk [vmem:[#allocation0] ss:$8 sm:$0xf] %vm39, %v38
    %s41 = scalar_lea.vmem %s0, 1
    %v42 = vld [vmem:[%s41] ss:$8 sm:$0xf]
    %43 = vrot.lane.b32.xlu0 %v42, 16
    %v44 = vpop.permute.xlu0 %43
    %vm45 = vcmask 261248
    %46 = vst.msk [vmem:[#allocation0] ss:$8 sm:$0xf] %vm45, %v44
    %s48 = sshllo.u32 0, 1
    %v50 = vld [vmem:[#allocation0] sm:%s48]
    %s51 = sshllo.u32 0, 1
    %52 = vst [vmem:[%s1] sm:%s51] %v50
    %s53 = scalar_lea.vmem [#allocation0], 8
    %v54 = vld [vmem:[%s53] sm:%s48]
    %s55 = sshllo.u32 0, 1
    %s56 = scalar_lea.vmem %s1, 1
    %57 = vst [vmem:[%s56] sm:%s55] %v54
    %s58 = scalar_lea.vmem [#allocation0], 16
    %v59 = vld [vmem:[%s58] sm:%s48]
    %s60 = sshllo.u32 0, 1
    %s61 = smul.addr 1, 2
    %s62 = scalar_lea.vmem %s1, %s61
    %63 = vst [vmem:[%s62] sm:%s60] %v59
    %s64 = scalar_lea.vmem [#allocation0], 24
    %v65 = vld [vmem:[%s64] sm:%s48]
    %s66 = sshllo.u32 0, 1
    %s67 = smul.addr 1, 3
    %s68 = scalar_lea.vmem %s1, %s67
    %69 = vst [vmem:[%s68] sm:%s66] %v65

// kernel: squeeze.7
$region0: #{squeeze.7}
  %s0 = inlined_call_operand.vmem [shape: f32[2,16,16,1,3], index: 0, kind: input, shape index: {}]
  %s1 = inlined_call_operand.vmem [shape: f32[512,3], index: 1, kind: output, shape index: {}]
  $region1: #{squeeze.7} parent=0
    #allocation0 [shape = 'u8[16384]{0}', space=vmem, size = 0x4000, scoped, tag = 'scoped mem for output reshape']
    %v2 = vld [vmem:[%s0] ss:$8 sm:$0xf]
    %v3 = vld [vmem:[%s0] ss:$8 sm:$0xf0]
    %vm4 = vcmask 1047556
    %v5 = vsel %vm4, %v3, %v2
    %vm6 = vcmask 130048
    %7 = vst.msk [vmem:[#allocation0] ss:$8 sm:$0xf] %vm6, %v5
    %s8 = scalar_lea.vmem [#allocation0], 4294967265
    %9 = vst.msk [vmem:[%s8] ss:$8 sm:$0xf0] %vm6, %v5
    %s10 = scalar_lea.vmem %s0, 64
    %v11 = vld [vmem:[%s10] ss:$8 sm:$0xf]
    %vm12 = vcmask 130048
    %s13 = scalar_lea.vmem [#allocation0], 2
    %14 = vst.msk [vmem:[%s13] ss:$8 sm:$0xf] %vm12, %v11
    %s15 = scalar_lea.vmem %s0, 7
    %v16 = vld [vmem:[%s15] sm:$0x1]
    %s17 = scalar_lea.vmem %s0, 38
    %v18 = vld [vmem:[%s17] sm:$0x2]
    %vm19 = vcmask 1041409
    %v20 = vsel %vm19, %v18, %v16
    %s21 = scalar_lea.vmem %s0, 183
    %s22 = smov 12
    %v23 = vld [vmem:[%s21] ss:$-56 sm:%s22]
    %vm24 = vcmask 1043458
    %v25 = vsel %vm24, %v23, %v20
    %s26 = scalar_lea.vmem %s0, 43
    %v27 = vld [vmem:[%s26] sm:$0x10]
    %vm28 = vcmask 1044484
    %v29 = vsel %vm28, %v27, %v25
    %s30 = scalar_lea.vmem %s0, 359
    %s31 = smov 96
    %v32 = vld [vmem:[%s30] ss:$-56 sm:%s31]
    %vm33 = vcmask 1046533
    %v34 = vsel %vm33, %v32, %v29
    %s35 = scalar_lea.vmem %s0, 48
    %v36 = vld [vmem:[%s35] sm:$0x80]
    %vm37 = vcmask 1047559
    %v38 = vsel %vm37, %v36, %v34
    %39 = vrot.lane.b32.xlu0 %v38, 112
    %v40 = vpop.permute.xlu0 %39
    %vm41 = vcmask 1048448
    %42 = vst.msk [vmem:[#allocation0] sm:$0x7] %vm41, %v40
    %s43 = scalar_lea.vmem [#allocation0], 5
    %44 = vst.msk [vmem:[%s43] sm:$0x38] %vm41, %v40
    %s45 = scalar_lea.vmem [#allocation0], 10
    %46 = vst.msk [vmem:[%s45] sm:$0xc0] %vm41, %v40
    %s47 = scalar_lea.vmem %s0, 87
    %s48 = smov 3
    %v49 = vld [vmem:[%s47] ss:$-56 sm:%s48]
    %s50 = scalar_lea.vmem %s0, 61
    %v51 = vld [vmem:[%s50] sm:$0x4]
    %vm52 = vcmask 1042434
    %v53 = vsel %vm52, %v51, %v49
    %s54 = scalar_lea.vmem %s0, 92
    %v55 = vld [vmem:[%s54] sm:$0x8]
    %vm56 = vcmask 1043459
    %v57 = vsel %vm56, %v55, %v53
    %58 = vrot.lane.b32.xlu0 %v57, 112
    %v59 = vpop.permute.xlu0 %58
    %vm60 = vcmask 1048448
    %s61 = scalar_lea.vmem [#allocation0], 18
    %62 = vst.msk [vmem:[%s61] ss:$6 sm:$0x3] %vm60, %v59
    %s63 = scalar_lea.vmem [#allocation0], 23
    %64 = vst.msk [vmem:[%s63] sm:$0xc] %vm60, %v59
    %s65 = scalar_lea.vmem %s0, 6
    %v66 = vld [vmem:[%s65] sm:$0x1]
    %s67 = scalar_lea.vmem %s0, 37
    %v68 = vld [vmem:[%s67] sm:$0x2]
    %vm69 = vcmask 1041409
    %v70 = vsel %vm69, %v68, %v66
    %s71 = scalar_lea.vmem %s0, 182
    %s72 = smov 12
    %v73 = vld [vmem:[%s71] ss:$-56 sm:%s72]
    %vm74 = vcmask 1043458
    %v75 = vsel %vm74, %v73, %v70
    %s76 = scalar_lea.vmem %s0, 42
    %v77 = vld [vmem:[%s76] sm:$0x10]
    %vm78 = vcmask 1044484
    %v79 = vsel %vm78, %v77, %v75
    %s80 = scalar_lea.vmem %s0, 358
    %s81 = smov 96
    %v82 = vld [vmem:[%s80] ss:$-56 sm:%s81]
    %vm83 = vcmask 1046533
    %v84 = vsel %vm83, %v82, %v79
    %s85 = scalar_lea.vmem %s0, 47
    %v86 = vld [vmem:[%s85] sm:$0x80]
    %vm87 = vcmask 1047559
    %v88 = vsel %vm87, %v86, %v84
    %89 = vrot.lane.b32.xlu0 %v88, 96
    %v90 = vpop.permute.xlu0 %89
    %vm91 = vcmask 917248
    %92 = vst.msk [vmem:[#allocation0] sm:$0x7] %vm91, %v90
    %s93 = scalar_lea.vmem [#allocation0], 5
    %94 = vst.msk [vmem:[%s93] sm:$0x38] %vm91, %v90
    %s95 = scalar_lea.vmem [#allocation0], 10
    %96 = vst.msk [vmem:[%s95] sm:$0xc0] %vm91, %v90
    %s97 = scalar_lea.vmem %s0, 86
    %s98 = smov 3
    %v99 = vld [vmem:[%s97] ss:$-56 sm:%s98]
    %s100 = scalar_lea.vmem %s0, 60
    %v101 = vld [vmem:[%s100] sm:$0x4]
    %vm102 = vcmask 1042434
    %v103 = vsel %vm102, %v101, %v99
    %s104 = scalar_lea.vmem %s0, 91
    %v105 = vld [vmem:[%s104] sm:$0x8]
    %vm106 = vcmask 1043459
    %v107 = vsel %vm106, %v105, %v103
    %108 = vrot.lane.b32.xlu0 %v107, 96
    %v109 = vpop.permute.xlu0 %108
    %vm110 = vcmask 917248
    %s111 = scalar_lea.vmem [#allocation0], 18
    %112 = vst.msk [vmem:[%s111] ss:$6 sm:$0x3] %vm110, %v109
    %s113 = scalar_lea.vmem [#allocation0], 23
    %114 = vst.msk [vmem:[%s113] sm:$0xc] %vm110, %v109
    %s115 = scalar_lea.vmem %s0, 5
    %v116 = vld [vmem:[%s115] sm:$0x1]
    %s117 = scalar_lea.vmem %s0, 36
    %v118 = vld [vmem:[%s117] sm:$0x2]
    %vm119 = vcmask 1041409
    %v120 = vsel %vm119, %v118, %v116
    %s121 = scalar_lea.vmem %s0, 181
    %s122 = smov 12
    %v123 = vld [vmem:[%s121] ss:$-56 sm:%s122]
    %vm124 = vcmask 1043458
    %v125 = vsel %vm124, %v123, %v120
    %s126 = scalar_lea.vmem %s0, 41
    %v127 = vld [vmem:[%s126] sm:$0x10]
    %vm128 = vcmask 1044484
    %v129 = vsel %vm128, %v127, %v125
    %s130 = scalar_lea.vmem %s0, 357
    %s131 = smov 96
    %v132 = vld [vmem:[%s130] ss:$-56 sm:%s131]
    %vm133 = vcmask 1046533
    %v134 = vsel %vm133, %v132, %v129
    %s135 = scalar_lea.vmem %s0, 46
    %v136 = vld [vmem:[%s135] sm:$0x80]
    %vm137 = vcmask 1047559
    %v138 = vsel %vm137, %v136, %v134
    %139 = vrot.lane.b32.xlu0 %v138, 80
    %v140 = vpop.permute.xlu0 %139
    %vm141 = vcmask 786048
    %142 = vst.msk [vmem:[#allocation0] sm:$0x7] %vm141, %v140
    %s143 = scalar_lea.vmem [#allocation0], 5
    %144 = vst.msk [vmem:[%s143] sm:$0x38] %vm141, %v140
    %s145 = scalar_lea.vmem [#allocation0], 10
    %146 = vst.msk [vmem:[%s145] sm:$0xc0] %vm141, %v140
    %s147 = scalar_lea.vmem %s0, 85
    %s148 = smov 3
    %v149 = vld [vmem:[%s147] ss:$-56 sm:%s148]
    %s150 = scalar_lea.vmem %s0, 59
    %v151 = vld [vmem:[%s150] sm:$0x4]
    %vm152 = vcmask 1042434
    %v153 = vsel %vm152, %v151, %v149
    %s154 = scalar_lea.vmem %s0, 90
    %v155 = vld [vmem:[%s154] sm:$0x8]
    %vm156 = vcmask 1043459
    %v157 = vsel %vm156, %v155, %v153
    %158 = vrot.lane.b32.xlu0 %v157, 80
    %v159 = vpop.permute.xlu0 %158
    %vm160 = vcmask 786048
    %s161 = scalar_lea.vmem [#allocation0], 18
    %162 = vst.msk [vmem:[%s161] ss:$6 sm:$0x3] %vm160, %v159
    %s163 = scalar_lea.vmem [#allocation0], 23
    %164 = vst.msk [vmem:[%s163] sm:$0xc] %vm160, %v159
    %s165 = scalar_lea.vmem %s0, 4
    %v166 = vld [vmem:[%s165] sm:$0x1]
    %s167 = scalar_lea.vmem %s0, 35
    %v168 = vld [vmem:[%s167] sm:$0x2]
    %vm169 = vcmask 1041409
    %v170 = vsel %vm169, %v168, %v166
    %s171 = scalar_lea.vmem %s0, 180
    %s172 = smov 12
    %v173 = vld [vmem:[%s171] ss:$-56 sm:%s172]
    %vm174 = vcmask 1043458
    %v175 = vsel %vm174, %v173, %v170
    %s176 = scalar_lea.vmem %s0, 40
    %v177 = vld [vmem:[%s176] sm:$0x10]
    %vm178 = vcmask 1044484
    %v179 = vsel %vm178, %v177, %v175
    %s180 = scalar_lea.vmem %s0, 356
    %s181 = smov 96
    %v182 = vld [vmem:[%s180] ss:$-56 sm:%s181]
    %vm183 = vcmask 1046533
    %v184 = vsel %vm183, %v182, %v179
    %s185 = scalar_lea.vmem %s0, 45
    %v186 = vld [vmem:[%s185] sm:$0x80]
    %vm187 = vcmask 1047559
    %v188 = vsel %vm187, %v186, %v184
    %189 = vrot.lane.b32.xlu0 %v188, 64
    %v190 = vpop.permute.xlu0 %189
    %vm191 = vcmask 654848
    %192 = vst.msk [vmem:[#allocation0] sm:$0x7] %vm191, %v190
    %s193 = scalar_lea.vmem [#allocation0], 5
    %194 = vst.msk [vmem:[%s193] sm:$0x38] %vm191, %v190
    %s195 = scalar_lea.vmem [#allocation0], 10
    %196 = vst.msk [vmem:[%s195] sm:$0xc0] %vm191, %v190
    %s197 = scalar_lea.vmem %s0, 84
    %s198 = smov 3
    %v199 = vld [vmem:[%s197] ss:$-56 sm:%s198]
    %s200 = scalar_lea.vmem %s0, 58
    %v201 = vld [vmem:[%s200] sm:$0x4]
    %vm202 = vcmask 1042434
    %v203 = vsel %vm202, %v201, %v199
    %s204 = scalar_lea.vmem %s0, 89
    %v205 = vld [vmem:[%s204] sm:$0x8]
    %vm206 = vcmask 1043459
    %v207 = vsel %vm206, %v205, %v203
    %208 = vrot.lane.b32.xlu0 %v207, 64
    %v209 = vpop.permute.xlu0 %208
    %vm210 = vcmask 654848
    %s211 = scalar_lea.vmem [#allocation0], 18
    %212 = vst.msk [vmem:[%s211] ss:$6 sm:$0x3] %vm210, %v209
    %s213 = scalar_lea.vmem [#allocation0], 23
    %214 = vst.msk [vmem:[%s213] sm:$0xc] %vm210, %v209
    %s215 = scalar_lea.vmem %s0, 3
    %v216 = vld [vmem:[%s215] sm:$0x1]
    %s217 = scalar_lea.vmem %s0, 34
    %v218 = vld [vmem:[%s217] sm:$0x2]
    %vm219 = vcmask 1041409
    %v220 = vsel %vm219, %v218, %v216
    %s221 = scalar_lea.vmem %s0, 179
    %s222 = smov 12
    %v223 = vld [vmem:[%s221] ss:$-56 sm:%s222]
    %vm224 = vcmask 1043458
    %v225 = vsel %vm224, %v223, %v220
    %s226 = scalar_lea.vmem %s0, 39
    %v227 = vld [vmem:[%s226] sm:$0x10]
    %vm228 = vcmask 1044484
    %v229 = vsel %vm228, %v227, %v225
    %s230 = scalar_lea.vmem %s0, 355
    %s231 = smov 96
    %v232 = vld [vmem:[%s230] ss:$-56 sm:%s231]
    %vm233 = vcmask 1046533
    %v234 = vsel %vm233, %v232, %v229
    %s235 = scalar_lea.vmem %s0, 44
    %v236 = vld [vmem:[%s235] sm:$0x80]
    %vm237 = vcmask 1047559
    %v238 = vsel %vm237, %v236, %v234
    %239 = vrot.lane.b32.xlu0 %v238, 48
    %v240 = vpop.permute.xlu0 %239
    %vm241 = vcmask 523648
    %242 = vst.msk [vmem:[#allocation0] sm:$0x7] %vm241, %v240
    %s243 = scalar_lea.vmem [#allocation0], 5
    %244 = vst.msk [vmem:[%s243] sm:$0x38] %vm241, %v240
    %s245 = scalar_lea.vmem [#allocation0], 10
    %246 = vst.msk [vmem:[%s245] sm:$0xc0] %vm241, %v240
    %s247 = scalar_lea.vmem %s0, 83
    %s248 = smov 3
    %v249 = vld [vmem:[%s247] ss:$-56 sm:%s248]
    %s250 = scalar_lea.vmem %s0, 57
    %v251 = vld [vmem:[%s250] sm:$0x4]
    %vm252 = vcmask 1042434
    %v253 = vsel %vm252, %v251, %v249
    %s254 = scalar_lea.vmem %s0, 88
    %v255 = vld [vmem:[%s254] sm:$0x8]
    %vm256 = vcmask 1043459
    %v257 = vsel %vm256, %v255, %v253
    %258 = vrot.lane.b32.xlu0 %v257, 48
    %v259 = vpop.permute.xlu0 %258
    %vm260 = vcmask 523648
    %s261 = scalar_lea.vmem [#allocation0], 18
    %262 = vst.msk [vmem:[%s261] ss:$6 sm:$0x3] %vm260, %v259
    %s263 = scalar_lea.vmem [#allocation0], 23
    %264 = vst.msk [vmem:[%s263] sm:$0xc] %vm260, %v259
    %s265 = scalar_lea.vmem %s0, 2
    %v266 = vld [vmem:[%s265] sm:$0x1]
    %s267 = scalar_lea.vmem %s0, 33
    %v268 = vld [vmem:[%s267] sm:$0x2]
    %vm269 = vcmask 1041409
    %v270 = vsel %vm269, %v268, %v266
    %s271 = scalar_lea.vmem %s0, 178
    %s272 = smov 12
    %v273 = vld [vmem:[%s271] ss:$-56 sm:%s272]
    %vm274 = vcmask 1043458
    %v275 = vsel %vm274, %v273, %v270
    %s276 = scalar_lea.vmem %s0, 38
    %v277 = vld [vmem:[%s276] sm:$0x10]
    %vm278 = vcmask 1044484
    %v279 = vsel %vm278, %v277, %v275
    %s280 = scalar_lea.vmem %s0, 354
    %s281 = smov 96
    %v282 = vld [vmem:[%s280] ss:$-56 sm:%s281]
    %vm283 = vcmask 1046533
    %v284 = vsel %vm283, %v282, %v279
    %s285 = scalar_lea.vmem %s0, 43
    %v286 = vld [vmem:[%s285] sm:$0x80]
    %vm287 = vcmask 1047559
    %v288 = vsel %vm287, %v286, %v284
    %289 = vrot.lane.b32.xlu0 %v288, 32
    %v290 = vpop.permute.xlu0 %289
    %vm291 = vcmask 392448
    %292 = vst.msk [vmem:[#allocation0] sm:$0x7] %vm291, %v290
    %s293 = scalar_lea.vmem [#allocation0], 5
    %294 = vst.msk [vmem:[%s293] sm:$0x38] %vm291, %v290
    %s295 = scalar_lea.vmem [#allocation0], 10
    %296 = vst.msk [vmem:[%s295] sm:$0xc0] %vm291, %v290
    %s297 = scalar_lea.vmem %s0, 82
    %s298 = smov 3
    %v299 = vld [vmem:[%s297] ss:$-56 sm:%s298]
    %s300 = scalar_lea.vmem %s0, 56
    %v301 = vld [vmem:[%s300] sm:$0x4]
    %vm302 = vcmask 1042434
    %v303 = vsel %vm302, %v301, %v299
    %s304 = scalar_lea.vmem %s0, 87
    %v305 = vld [vmem:[%s304] sm:$0x8]
    %vm306 = vcmask 1043459
    %v307 = vsel %vm306, %v305, %v303
    %308 = vrot.lane.b32.xlu0 %v307, 32
    %v309 = vpop.permute.xlu0 %308
    %vm310 = vcmask 392448
    %s311 = scalar_lea.vmem [#allocation0], 18
    %312 = vst.msk [vmem:[%s311] ss:$6 sm:$0x3] %vm310, %v309
    %s313 = scalar_lea.vmem [#allocation0], 23
    %314 = vst.msk [vmem:[%s313] sm:$0xc] %vm310, %v309
    %s315 = scalar_lea.vmem %s0, 1
    %v316 = vld [vmem:[%s315] sm:$0x1]
    %s317 = scalar_lea.vmem %s0, 32
    %v318 = vld [vmem:[%s317] sm:$0x2]
    %vm319 = vcmask 1041409
    %v320 = vsel %vm319, %v318, %v316
    %s321 = scalar_lea.vmem %s0, 177
    %s322 = smov 12
    %v323 = vld [vmem:[%s321] ss:$-56 sm:%s322]
    %vm324 = vcmask 1043458
    %v325 = vsel %vm324, %v323, %v320
    %s326 = scalar_lea.vmem %s0, 37
    %v327 = vld [vmem:[%s326] sm:$0x10]
    %vm328 = vcmask 1044484
    %v329 = vsel %vm328, %v327, %v325
    %s330 = scalar_lea.vmem %s0, 353
    %s331 = smov 96
    %v332 = vld [vmem:[%s330] ss:$-56 sm:%s331]
    %vm333 = vcmask 1046533
    %v334 = vsel %vm333, %v332, %v329
    %s335 = scalar_lea.vmem %s0, 42
    %v336 = vld [vmem:[%s335] sm:$0x80]
    %vm337 = vcmask 1047559
    %v338 = vsel %vm337, %v336, %v334
    %339 = vrot.lane.b32.xlu0 %v338, 16
    %v340 = vpop.permute.xlu0 %339
    %vm341 = vcmask 261248
    %342 = vst.msk [vmem:[#allocation0] sm:$0x7] %vm341, %v340
    %s343 = scalar_lea.vmem [#allocation0], 5
    %344 = vst.msk [vmem:[%s343] sm:$0x38] %vm341, %v340
    %s345 = scalar_lea.vmem [#allocation0], 10
    %346 = vst.msk [vmem:[%s345] sm:$0xc0] %vm341, %v340
    %s347 = scalar_lea.vmem %s0, 81
    %s348 = smov 3
    %v349 = vld [vmem:[%s347] ss:$-56 sm:%s348]
    %s350 = scalar_lea.vmem %s0, 55
    %v351 = vld [vmem:[%s350] sm:$0x4]
    %vm352 = vcmask 1042434
    %v353 = vsel %vm352, %v351, %v349
    %s354 = scalar_lea.vmem %s0, 86
    %v355 = vld [vmem:[%s354] sm:$0x8]
    %vm356 = vcmask 1043459
    %v357 = vsel %vm356, %v355, %v353
    %358 = vrot.lane.b32.xlu0 %v357, 16
    %v359 = vpop.permute.xlu0 %358
    %vm360 = vcmask 261248
    %s361 = scalar_lea.vmem [#allocation0], 18
    %362 = vst.msk [vmem:[%s361] ss:$6 sm:$0x3] %vm360, %v359
    %s363 = scalar_lea.vmem [#allocation0], 23
    %364 = vst.msk [vmem:[%s363] sm:$0xc] %vm360, %v359
    %s366 = sshllo.u32 0, 4
    %v368 = vld [vmem:[#allocation0] sm:%s366]
    %s369 = sshllo.u32 0, 4
    %370 = vst [vmem:[%s1] sm:%s369] %v368
    %s371 = scalar_lea.vmem [#allocation0], 8
    %v372 = vld [vmem:[%s371] sm:%s366]
    %s373 = sshllo.u32 0, 4
    %s374 = scalar_lea.vmem %s1, 4
    %375 = vst [vmem:[%s374] sm:%s373] %v372
    %s376 = scalar_lea.vmem [#allocation0], 16
    %v377 = vld [vmem:[%s376] sm:%s366]
    %s378 = sshllo.u32 0, 4
    %s379 = smul.addr 4, 2
    %s380 = scalar_lea.vmem %s1, %s379
    %381 = vst [vmem:[%s380] sm:%s378] %v377
    %s382 = scalar_lea.vmem [#allocation0], 24
    %v383 = vld [vmem:[%s382] sm:%s366]
    %s384 = sshllo.u32 0, 4
    %s385 = smul.addr 4, 3
    %s386 = scalar_lea.vmem %s1, %s385
    %387 = vst [vmem:[%s386] sm:%s384] %v383

// kernel: _forward.2
$region0: #{_forward.2}
  #allocation0 [shape = 'u32[]', space=smem, size = 0x4, offset = 0x4, fixed_abs, tag = 'smem constant byte address 0x4 - core index']
  #allocation1 [shape = 'u32[144,128]{1,0:T(1,128)}', space=vmem, size = 0x12000, scoped, tag = 'internal scratch']
  %s0 = inlined_call_operand.vmem [shape: f32[3,512], index: 0, kind: input, shape index: {}]
  %s1 = inlined_call_operand.vmem [shape: f32[3,512], index: 1, kind: input, shape index: {}]
  %s2 = inlined_call_operand.vmem [shape: f32[3,512], index: 2, kind: input, shape index: {}]
  %s3 = inlined_call_operand.vmem [shape: s32[1,512], index: 3, kind: output, shape index: {}]
  %s4 = sld [smem:[#allocation0]]
  $region22: #{_forward.2} parent=0
    _
  %s6 = ssub.s32 1, %s4
  %s7 = scalar_select 0, %s6, %s4
  // Predicated region
  $region2: #{_forward.2} parent=0 // pred_check
    _
  $region3: #{_forward.2} parent=0 // pred_check_branch
    %9 = sbr.rel (0) target = $region5
  $region4: #{_forward.2} parent=0 // pred_region
    _
  $region5: #{_forward.2} parent=0 // pred_fallthru
    _
  // Predicated region
  $region6: #{_forward.2} parent=0 // pred_check
    _
  $region7: #{_forward.2} parent=0 // pred_check_branch
    %11 = sbr.rel (0) target = $region9
  $region8: #{_forward.2} parent=0 // pred_region
    _
  $region9: #{_forward.2} parent=0 // pred_fallthru
    _
  // Predicated region
  $region10: #{_forward.2} parent=0 // pred_check
    _
  $region11: #{_forward.2} parent=0 // pred_check_branch
    %13 = sbr.rel (0) target = $region13
  $region12: #{_forward.2} parent=0 // pred_region
    _
  $region13: #{_forward.2} parent=0 // pred_fallthru
    _
  %v14 = vld [vmem:[%s0] ss:$4 sm:$0xf]
  %s15 = scalar_lea.vmem %s0, 1
  %v16 = vld [vmem:[%s15] ss:$4 sm:$0xf]
  %s17 = scalar_lea.vmem %s0, 2
  %v18 = vld [vmem:[%s17] ss:$4 sm:$0xf]
  %v19 = vld [vmem:[%s1] ss:$4 sm:$0xf]
  %v20 = vmul.f32 %v14, %v19
  %s21 = scalar_lea.vmem %s1, 1
  %v22 = vld [vmem:[%s21] ss:$4 sm:$0xf]
  %v23 = vmul.f32 %v16, %v22
  %v24 = vadd.f32 %v20, %v23
  %s25 = scalar_lea.vmem %s1, 2
  %v26 = vld [vmem:[%s25] ss:$4 sm:$0xf]
  %v27 = vmul.f32 %v18, %v26
  %v28 = vadd.f32 %v24, %v27
  %v29 = vld [vmem:[%s2] ss:$4 sm:$0xf]
  %v30 = vmul.f32 %v14, %v29
  %s31 = scalar_lea.vmem %s2, 1
  %v32 = vld [vmem:[%s31] ss:$4 sm:$0xf]
  %v33 = vmul.f32 %v16, %v32
  %v34 = vadd.f32 %v30, %v33
  %s35 = scalar_lea.vmem %s2, 2
  %v36 = vld [vmem:[%s35] ss:$4 sm:$0xf]
  %v37 = vmul.f32 %v18, %v36
  %v38 = vadd.f32 %v34, %v37
  %v39 = vmul.f32 %v28, 31.0
  %v40 = vadd.f32 %v39, 0.5
  %v41 = vfloor.f32 %v40
  %v42 = vmax.f32 %v41, 0.0
  %v43 = vmin.f32 %v42, 31.0
  %v44 = vsub.f32 1.0, %v38
  %v45 = vmul.f32 %v44, 31.0
  %v46 = vadd.f32 %v45, 0.5
  %v47 = vfloor.f32 %v46
  %v48 = vmax.f32 %v47, 0.0
  %v49 = vmin.f32 %v48, 31.0
  %v50 = vcvt.f32.s32.to.zero.pseudo %v49
  %v51 = vmul.u32 %v50, 32
  %v52 = vcvt.f32.s32.to.zero.pseudo %v43
  %v53 = vadd.s32 %v51, %v52
  %v54 = vlaneseq
  %vm55 = vcmp.ge.s32.totalorder %v54, 0
  %vm56 = vcmp.lt.s32.totalorder %v54, 512
  %vm57 = vmand %vm55, %vm56
  %58 = vst.msk [vmem:[%s3] sm:$0xf] %vm57, %v53
  // Predicated region
  $region14: #{_forward.2} parent=0 // pred_check
    _
  $region15: #{_forward.2} parent=0 // pred_check_branch
    %60 = sbr.rel (0) target = $region17
  $region16: #{_forward.2} parent=0 // pred_region
    _
  $region17: #{_forward.2} parent=0 // pred_fallthru
    _
  // Predicated region
  $region18: #{_forward.2} parent=0 // pred_check
    _
  $region19: #{_forward.2} parent=0 // pred_check_branch
    %62 = sbr.rel (0) target = $region21
  $region20: #{_forward.2} parent=0 // pred_region
    _
  $region21: #{_forward.2} parent=0 // pred_fallthru
    _

// kernel: _forward.3
$region0: #{_forward.3}
  #allocation0 [shape = 'u32[]', space=smem, size = 0x4, offset = 0x4, fixed_abs, tag = 'smem constant byte address 0x4 - core index']
  #allocation1 [shape = 'u32[144,128]{1,0:T(1,128)}', space=vmem, size = 0x12000, scoped, tag = 'internal scratch']
  %s0 = inlined_call_operand.vmem [shape: f32[3,512], index: 0, kind: input, shape index: {}]
  %s1 = inlined_call_operand.vmem [shape: s32[1,512], index: 1, kind: input, shape index: {}]
  %s2 = inlined_call_operand.vmem [shape: f32[4,512], index: 2, kind: output, shape index: {}]
  %s3 = sld [smem:[#allocation0]]
  $region18: #{_forward.3} parent=0
    _
  %s5 = ssub.s32 1, %s3
  %s6 = scalar_select 0, %s5, %s3
  // Predicated region
  $region2: #{_forward.3} parent=0 // pred_check
    _
  $region3: #{_forward.3} parent=0 // pred_check_branch
    %8 = sbr.rel (0) target = $region5
  $region4: #{_forward.3} parent=0 // pred_region
    _
  $region5: #{_forward.3} parent=0 // pred_fallthru
    _
  // Predicated region
  $region6: #{_forward.3} parent=0 // pred_check
    _
  $region7: #{_forward.3} parent=0 // pred_check_branch
    %10 = sbr.rel (0) target = $region9
  $region8: #{_forward.3} parent=0 // pred_region
    _
  $region9: #{_forward.3} parent=0 // pred_fallthru
    _
  %v11 = vld [vmem:[%s1] sm:$0xf]
  %vm12 = vcmp.lt.s32.totalorder %v11, 0
  %v13 = vld [vmem:[%s0] sm:$0x77]
  %v14 = vld [vmem:[%s0 + $0x8] sm:$0x77]
  %v18 = vunpack.c.l.s4 1966171168
  %v19 = vunpack.c.0.s8 %v18
  %v20 = vlaneseq
  %v21 = vshrl.u32 %v20, 7
  %v22 = vsub.s32 %v19, %v21
  %v23 = vrot.slane %v13, %v22
  %v25 = vunpack.c.l.s4 1966171168
  %v26 = vunpack.c.0.s8 %v25
  %v27 = vlaneseq
  %v28 = vshrl.u32 %v27, 7
  %v29 = vsub.s32 %v26, %v28
  %v30 = vrot.slane %v14, %v29
  %v31 = vcombine.low %v23, %v30
  %v33 = vunpack.c.l.s4 1966171168
  %v34 = vunpack.c.0.s8 %v33
  %v35 = vlaneseq
  %v36 = vshrl.u32 %v35, 7
  %v37 = vsub.s32 %v34, %v36
  %v38 = vrot.slane %v31, %v37
  %v40 = vsel %vm12, 0.0, %v38
  %v41 = vlaneseq
  %vm42 = vcmp.ge.s32.totalorder %v41, 0
  %vm43 = vcmp.lt.s32.totalorder %v41, 512
  %vm44 = vmand %vm42, %vm43
  %45 = vst.msk [vmem:[%s2] ss:$4 sm:$0xf] %vm44, %v40
  %v46 = vcombine.high %v23, %v30
  %v48 = vunpack.c.l.s4 1966171168
  %v49 = vunpack.c.0.s8 %v48
  %v50 = vlaneseq
  %v51 = vshrl.u32 %v50, 7
  %v52 = vsub.s32 %v49, %v51
  %v53 = vrot.slane %v46, %v52
  %v55 = vsel %vm12, 0.0, %v53
  %s56 = scalar_lea.vmem %s2, 1
  %57 = vst.msk [vmem:[%s56] ss:$4 sm:$0xf] %vm44, %v55
  %v58 = vcombine.high %v38, %v38
  %v60 = vsel %vm12, 0.0, %v58
  %s61 = scalar_lea.vmem %s2, 2
  %62 = vst.msk [vmem:[%s61] ss:$4 sm:$0xf] %vm44, %v60
  %v63 = vsel %vm12, 1, 0
  %v64 = vcvt.s32.f32 %v63
  %v65 = vsub.f32 1.0, %v64
  %s66 = scalar_lea.vmem %s2, 3
  %67 = vst.msk [vmem:[%s66] ss:$4 sm:$0xf] %vm44, %v65
  // Predicated region
  $region10: #{_forward.3} parent=0 // pred_check
    _
  $region11: #{_forward.3} parent=0 // pred_check_branch
    %69 = sbr.rel (0) target = $region13
  $region12: #{_forward.3} parent=0 // pred_region
    _
  $region13: #{_forward.3} parent=0 // pred_fallthru
    _
  // Predicated region
  $region14: #{_forward.3} parent=0 // pred_check
    _
  $region15: #{_forward.3} parent=0 // pred_check_branch
    %71 = sbr.rel (0) target = $region17
  $region16: #{_forward.3} parent=0 // pred_region
    _
  $region17: #{_forward.3} parent=0 // pred_fallthru
    _

</llo_original>
